<compile_context>
chip_gen: v7x
topology: tpu7x:2x2x1
jax: 0.10.0
libtpu: 0.0.40
codegen_flags: <defaults>
</compile_context>

<pallas_src>
import functools
import math

import jax
import jax.numpy as jnp
from jax.experimental import pallas as pl
from jax.experimental.pallas import tpu as pltpu

LANE = 128      # vreg lane width
OUT_PAD = 128   # lane-dense padded output width (wrapper slices column 0)
MiB = 1024 * 1024


def _round_up(n, m):
    return ((n + m - 1) // m) * m


def _pad_cast(a, shape, dtype):
    """Cast, and zero-pad only if needed (skips the HBM copy for aligned operands)."""
    a = a.astype(dtype)
    if a.shape == tuple(shape):
        return a
    return jnp.zeros(shape, dtype).at[tuple(slice(0, s) for s in a.shape)].set(a)


def _vmem_capacity_bytes():
    try:
        return int(pltpu.get_tpu_info().vmem_capacity_bytes)
    except Exception:
        return 64 * MiB   # conservative fallback (v7x per-core VMEM)


# ----------------------------------------------------------------------------- kernels
def _bnn_kernel_resident(n_hidden, cd,
                         x_ref, w_in_ref, b_in_ref, w_h_ref, b_h_ref,
                         w_out_ref, b_out_ref, o_ref):
    # Input block: BayesLinear(input_dim -> hidden) + ReLU. MXU in bf16, f32 accum.
    h = jnp.dot(x_ref[...], w_in_ref[...], preferred_element_type=jnp.float32)
    h = jnp.maximum(h + b_in_ref[...], 0.0)

    def layer(hh, w, b):
        hh = jnp.dot(hh.astype(cd), w, preferred_element_type=jnp.float32)
        return jnp.maximum(hh + b, 0.0)

    if n_hidden <= 16:
        # Static unroll: full LLO-scheduler visibility across layers.
        for i in range(n_hidden):
            h = layer(h, w_h_ref[i], b_h_ref[i])
    else:
        h = jax.lax.fori_loop(
            0, n_hidden, lambda i, hh: layer(hh, w_h_ref[i], b_h_ref[i]), h,
            unroll=4)

    # Output block: BayesLinear(hidden -> 1) as a lane-dense MXU matmul.  Real weights
    # live in column 0 of the (H_p, 128) slab, rest are zeros -> unmasked vst.
    out = jnp.dot(h.astype(cd), w_out_ref[...], preferred_element_type=jnp.float32)
    o_ref[...] = (out + b_out_ref[0]).astype(o_ref.dtype)


def _bnn_kernel_streamed(n_hidden, cd,
                         x_ref, w_in_ref, b_in_ref, w_h_ref, b_h_ref,
                         w_out_ref, b_out_ref, o_ref, h_ref):
    # Grid = (batch_tiles, n_hidden); hidden-layer axis is innermost ("arbitrary").
    # One (H_p, H_p) weight tile is resident per step (double-buffered by the pipeline),
    # activations carried across the layer axis in VMEM scratch.
    l = pl.program_id(1)

    @pl.when(l == 0)
    def _():
        h0 = jnp.dot(x_ref[...], w_in_ref[...], preferred_element_type=jnp.float32)
        h_ref[...] = jnp.maximum(h0 + b_in_ref[...], 0.0)

    h = jnp.dot(h_ref[...].astype(cd), w_h_ref[0], preferred_element_type=jnp.float32)
    h = jnp.maximum(h + b_h_ref[0], 0.0)
    h_ref[...] = h

    @pl.when(l == n_hidden - 1)
    def _():
        out = jnp.dot(h.astype(cd), w_out_ref[...], preferred_element_type=jnp.float32)
        o_ref[...] = (out + b_out_ref[0]).astype(o_ref.dtype)


# ----------------------------------------------------------------------------- wrapper
def bnn_forward(x, w_in, b_in, w_h, b_h, w_out, b_out, *,
                compute_dtype=jnp.bfloat16, tile_b=None, force_stream=None):
    """Forward pass of the Bayesian MLP with one weight sample per layer.

    x:(B,d_in) f32, w_in:(d_in,H), b_in:(1,H), w_h:(n_hidden,H,H), b_h:(n_hidden,1,H),
    w_out:(H,1), b_out:(1,1).  Returns (B, 1) in x.dtype.
    """
    B, d_in = x.shape
    H = w_in.shape[1]
    n_hidden = w_h.shape[0]

    cd = compute_dtype
    f32 = jnp.float32
    cd_bytes = jnp.dtype(cd).itemsize
    sub = max(8, 32 // cd_bytes)        # bf16 packs 16 rows per vreg; f32 packs 8

    d_in_p = _round_up(d_in, LANE)
    H_p = _round_up(H, LANE)

    # Batch tiling: one block at small B; split into >= 2 "parallel" tiles from B>=256
    # so both v7x TensorCores get work; 256-row tiles for big B.
    if tile_b is None:
        if B < 256:
            tile_b = _round_up(B, sub)
        elif B <= 512:
            tile_b = _round_up(pl.cdiv(B, 2), sub)
        else:
            tile_b = 256
    B_p = _round_up(B, tile_b)
    n_btiles = B_p // tile_b

    # Cast (+ zero-pad only when unaligned).  Padded input lanes hit zero weight rows,
    # padded hidden lanes stay exactly 0 through bias/ReLU -> numerically identical.
    # Padded batch rows (B..B_p) compute ReLU(bias) garbage that the wrapper slices off.
    # TODO(synk): in a deployed model, pad/cast the weight stack once (outside the
    # per-forward call) instead of rebuilding a padded HBM copy every forward.
    xp = _pad_cast(x, (B_p, d_in_p), cd)
    w_in_p = _pad_cast(w_in, (d_in_p, H_p), cd)
    b_in_p = _pad_cast(b_in, (1, H_p), f32)
    n_stack = max(n_hidden, 1)
    w_h_src = w_h if n_hidden > 0 else jnp.zeros((1, H, H), f32)
    b_h_src = b_h if n_hidden > 0 else jnp.zeros((1, 1, H), f32)
    w_h_p = _pad_cast(w_h_src, (n_stack, H_p, H_p), cd)
    b_h_p = _pad_cast(b_h_src, (n_stack, 1, H_p), f32)
    w_out_p = jnp.zeros((H_p, OUT_PAD), cd).at[:H, 0].set(w_out.reshape(H).astype(cd))
    b_out_s = jnp.asarray(b_out, dtype=f32).reshape(1)          # SMEM scalar

    # -------- VMEM budgeting (per generation, via get_tpu_info) -------------------
    vmem_cap = _vmem_capacity_bytes()
    w_inv = w_in_p.size * cd_bytes + b_in_p.size * 4 + w_out_p.size * cd_bytes
    w_hid = w_h_p.size * cd_bytes + b_h_p.size * 4
    io = 2 * (tile_b * d_in_p * cd_bytes + tile_b * OUT_PAD * 4)   # dbl-buffered x/out
    act = 4 * tile_b * H_p * 4                                     # live f32 h + bf16 casts
    resident_needed = w_inv + w_hid + io + act                     # weights single-buffered
    streamed_needed = (w_inv + 2 * (H_p * H_p * cd_bytes + H_p * 4)   # 2 layer tiles
                       + io + act + tile_b * H_p * 4)                 # + h scratch

    if force_stream is None:
        stream = resident_needed > int(0.8 * vmem_cap)
    else:
        stream = bool(force_stream)
    stream = stream and n_hidden >= 1

    vmem_needed = streamed_needed if stream else resident_needed
    vmem_limit = min(max(vmem_needed + 4 * MiB, 32 * MiB), int(0.9 * vmem_cap))
    # TODO(synk): if streamed_needed still exceeds ~90% of per-core VMEM, further split
    # H_p into column tiles of W_h; not needed for realistic hidden_dim.

    flops = 2 * B_p * (d_in_p * H_p + n_hidden * H_p * H_p + H_p * OUT_PAD)
    bytes_accessed = int((xp.size + w_in_p.size + w_h_p.size + w_out_p.size) * cd_bytes
                         + (b_in_p.size + b_h_p.size + B_p * OUT_PAD + 1) * 4)
    cost = pl.CostEstimate(flops=flops, transcendentals=0, bytes_accessed=bytes_accessed)

    if not stream:
        # Resident path: whole weight stack lives in VMEM (single-buffered), grid only
        # over batch tiles.
        out_p = pl.pallas_call(
            functools.partial(_bnn_kernel_resident, n_hidden, cd),
            out_shape=jax.ShapeDtypeStruct((B_p, OUT_PAD), f32),
            grid_spec=pltpu.PrefetchScalarGridSpec(
                num_scalar_prefetch=0,
                grid=(n_btiles,),
                in_specs=[
                    pl.BlockSpec((tile_b, d_in_p), lambda i: (i, 0)),         # x tile
                    pl.BlockSpec((d_in_p, H_p), lambda i: (0, 0),
                                 pipeline_mode=pl.Buffered(1)),               # W_in
                    pl.BlockSpec((1, H_p), lambda i: (0, 0),
                                 pipeline_mode=pl.Buffered(1)),               # b_in
                    pl.BlockSpec((n_stack, H_p, H_p), lambda i: (0, 0, 0),
                                 pipeline_mode=pl.Buffered(1)),               # W_h stack
                    pl.BlockSpec((n_stack, 1, H_p), lambda i: (0, 0, 0),
                                 pipeline_mode=pl.Buffered(1)),               # b_h stack
                    pl.BlockSpec((H_p, OUT_PAD), lambda i: (0, 0),
                                 pipeline_mode=pl.Buffered(1)),               # W_out slab
                    pl.BlockSpec(memory_space=pltpu.MemorySpace.SMEM),        # b_out
                ],
                out_specs=pl.BlockSpec((tile_b, OUT_PAD), lambda i: (i, 0)),
            ),
            compiler_params=pltpu.CompilerParams(
                dimension_semantics=("parallel",),
                vmem_limit_bytes=vmem_limit),
            cost_estimate=cost,
        )(xp, w_in_p, b_in_p, w_h_p, b_h_p, w_out_p, b_out_s)
    else:
        # Streaming path: hidden layers streamed over an inner "arbitrary" grid axis,
        # activations carried in VMEM scratch; only ~2 layer tiles resident.
        out_p = pl.pallas_call(
            functools.partial(_bnn_kernel_streamed, n_hidden, cd),
            out_shape=jax.ShapeDtypeStruct((B_p, OUT_PAD), f32),
            grid_spec=pltpu.PrefetchScalarGridSpec(
                num_scalar_prefetch=0,
                grid=(n_btiles, n_hidden),
                in_specs=[
                    pl.BlockSpec((tile_b, d_in_p), lambda i, l: (i, 0)),      # x tile
                    pl.BlockSpec((d_in_p, H_p), lambda i, l: (0, 0),
                                 pipeline_mode=pl.Buffered(1)),               # W_in
                    pl.BlockSpec((1, H_p), lambda i, l: (0, 0),
                                 pipeline_mode=pl.Buffered(1)),               # b_in
                    pl.BlockSpec((1, H_p, H_p), lambda i, l: (l, 0, 0)),      # W_h[l]
                    pl.BlockSpec((1, 1, H_p), lambda i, l: (l, 0, 0)),        # b_h[l]
                    pl.BlockSpec((H_p, OUT_PAD), lambda i, l: (0, 0),
                                 pipeline_mode=pl.Buffered(1)),               # W_out slab
                    pl.BlockSpec(memory_space=pltpu.MemorySpace.SMEM),        # b_out
                ],
                out_specs=pl.BlockSpec((tile_b, OUT_PAD), lambda i, l: (i, 0)),
                scratch_shapes=[pltpu.VMEM((tile_b, H_p), f32)],              # carried h
            ),
            compiler_params=pltpu.CompilerParams(
                dimension_semantics=("parallel", "arbitrary"),
                vmem_limit_bytes=vmem_limit),
            cost_estimate=cost,
        )(xp, w_in_p, b_in_p, w_h_p, b_h_p, w_out_p, b_out_s)

    # TODO(synk): for B ~ 1e5+ the (B_p, 128) f32 slab inflates HBM writeback 128x;
    # store bf16 or a lane-major layout and fuse the column-0 slice.
    # TODO(synk): num_MC is stored by the module but unused in forward(); batching
    # num_MC weight samples via an extra "parallel" grid axis would amortize launch,
    # padding and weight DMA across samples for end-to-end BNN inference.
    return out_p[:B, :1].astype(x.dtype)


# ----------------------------------------------------------------------------- helpers
def sample_bayes_linear(key, in_features, out_features, prior_sigma=0.1):
    """torchbnn-style init + one reparameterized weight sample.

    weight_mu ~ U(-stdv, stdv), stdv = 1/sqrt(in), weight_log_sigma = log(prior_sigma);
    forward samples W = W_mu + exp(W_log_sigma) * eps.
    Returns (W^T of shape (in, out), b of shape (1, out))."""
    k1, k2, k3, k4 = jax.random.split(key, 4)
    stdv = 1.0 / math.sqrt(in_features)
    w_mu = jax.random.uniform(k1, (out_features, in_features), jnp.float32,
                              minval=-stdv, maxval=stdv)
    b_mu = jax.random.uniform(k2, (out_features,), jnp.float32,
                              minval=-stdv, maxval=stdv)
    sig = math.exp(math.log(prior_sigma))
    w = w_mu + sig * jax.random.normal(k3, (out_features, in_features), jnp.float32)
    b = b_mu + sig * jax.random.normal(k4, (out_features,), jnp.float32)
    return w.T, b.reshape(1, out_features)


def reference_forward(x, w_in, b_in, w_h, b_h, w_out, b_out,
                      compute_dtype=jnp.bfloat16):
    """Plain-JAX reference mirroring the kernel's dtype policy (bf16 MXU, f32 accum)."""
    cd = compute_dtype
    h = jnp.dot(x.astype(cd), w_in.astype(cd), preferred_element_type=jnp.float32)
    h = jnp.maximum(h + b_in, 0.0)
    for i in range(w_h.shape[0]):
        h = jnp.dot(h.astype(cd), w_h[i].astype(cd), preferred_element_type=jnp.float32)
        h = jnp.maximum(h + b_h[i], 0.0)
    out = jnp.dot(h.astype(cd), w_out.astype(cd), preferred_element_type=jnp.float32)
    return out + b_out


if __name__ == "__main__":
    # Small shapes consistent with the module's forward.
    batch = 16
    input_dim = 16
    hidden_dim = 32
    n_hidden = 2
    num_MC = 4          # stored by the module, unused in forward (unused here too)
    prior_sigma = 0.1

    root = jax.random.PRNGKey(0)
    kx, k_in, k_out, *k_hid = jax.random.split(root, 3 + n_hidden)

    x = jax.random.normal(kx, (batch, input_dim), jnp.float32)

    # One MC weight sample per layer (torchbnn draws fresh eps each forward call).
    w_in, b_in = sample_bayes_linear(k_in, input_dim, hidden_dim, prior_sigma)
    w_hs, b_hs = [], []
    for kh in k_hid:
        w, b = sample_bayes_linear(kh, hidden_dim, hidden_dim, prior_sigma)
        w_hs.append(w)
        b_hs.append(b)
    w_h = jnp.stack(w_hs)                  # (n_hidden, hidden, hidden)
    b_h = jnp.stack(b_hs)                  # (n_hidden, 1, hidden)
    w_out, b_out = sample_bayes_linear(k_out, hidden_dim, 1, prior_sigma)

    ref = reference_forward(x, w_in, b_in, w_h, b_h, w_out, b_out)

    # Resident path (default for small weight stacks).
    out = bnn_forward(x, w_in, b_in, w_h, b_h, w_out, b_out)
    out = jax.block_until_ready(out)
    assert out.shape == (batch, 1)
    assert jnp.allclose(out, ref, atol=1e-3, rtol=1e-3)

    # Streaming path (forced here to exercise the large-weight-stack route).
    out_s = bnn_forward(x, w_in, b_in, w_h, b_h, w_out, b_out, force_stream=True)
    out_s = jax.block_until_ready(out_s)
    assert out_s.shape == (batch, 1)
    assert jnp.allclose(out_s, ref, atol=1e-3, rtol=1e-3)

    # TODO(synk): explain_mode branch (x.unsqueeze(-1)) not exercised; module default is False.
    print("KERNEL_OK")
</pallas_src>

<mosaic_0001>
module attributes {stable_mosaic.version = 11 : i64} {
  func.func @_bnn_kernel_resident(%arg0: i32, %arg1: memref<16x128xbf16, #tpu.memory_space<vmem>>, %arg2: memref<128x128xbf16, #tpu.memory_space<vmem>>, %arg3: memref<1x128xf32, #tpu.memory_space<vmem>>, %arg4: memref<2x128x128xbf16, #tpu.memory_space<vmem>>, %arg5: memref<2x1x128xf32, #tpu.memory_space<vmem>>, %arg6: memref<128x128xbf16, #tpu.memory_space<vmem>>, %arg7: memref<1xf32, #tpu.memory_space<smem>>, %arg8: memref<16x128xf32, #tpu.memory_space<vmem>>) attributes {dimension_semantics = [#tpu.dimension_semantics<parallel>], iteration_bounds = array<i64: 1>, scalar_prefetch = 0 : i64, scratch_operands = 0 : i64, tpu.core_type = #tpu.core_type<tc>, window_params = [{transform_indices = @transform_0, window_bounds = array<i64: 16, 128>}, {pipeline_mode = #tpu.pipeline_mode<synchronous>, transform_indices = @transform_1, window_bounds = array<i64: 128, 128>}, {pipeline_mode = #tpu.pipeline_mode<synchronous>, transform_indices = @transform_2, window_bounds = array<i64: 1, 128>}, {pipeline_mode = #tpu.pipeline_mode<synchronous>, transform_indices = @transform_3, window_bounds = array<i64: 2, 128, 128>}, {pipeline_mode = #tpu.pipeline_mode<synchronous>, transform_indices = @transform_4, window_bounds = array<i64: 2, 1, 128>}, {pipeline_mode = #tpu.pipeline_mode<synchronous>, transform_indices = @transform_5, window_bounds = array<i64: 128, 128>}, {transform_indices = @transform_6, window_bounds = array<i64: 1>}, {transform_indices = @transform_7, window_bounds = array<i64: 16, 128>}]} {
    %c0 = arith.constant 0 : index
    %c0_0 = arith.constant 0 : index
    %0 = vector.load %arg1[%c0, %c0_0] : memref<16x128xbf16, #tpu.memory_space<vmem>>, vector<16x128xbf16>
    %c0_1 = arith.constant 0 : index
    %c0_2 = arith.constant 0 : index
    %1 = vector.load %arg2[%c0_1, %c0_2] : memref<128x128xbf16, #tpu.memory_space<vmem>>, vector<128x128xbf16>
    %cst = arith.constant dense<0.000000e+00> : vector<16x128xf32>
    %2 = tpu.matmul %0, %1, %cst {dimension_numbers = #tpu.dot_dimension_numbers<[1], [0], [0], [1], [0, 0, 1, 1], [], []>} : vector<16x128xbf16>, vector<128x128xbf16>, vector<16x128xf32> -> vector<16x128xf32>
    %c0_3 = arith.constant 0 : index
    %c0_4 = arith.constant 0 : index
    %3 = vector.load %arg3[%c0_3, %c0_4] : memref<1x128xf32, #tpu.memory_space<vmem>>, vector<1x128xf32>
    %4 = vector.broadcast %3 : vector<1x128xf32> to vector<16x128xf32>
    %5 = arith.addf %2, %4 : vector<16x128xf32>
    %cst_5 = arith.constant 0.000000e+00 : f32
    %6 = vector.broadcast %cst_5 : f32 to vector<16x128xf32>
    %7 = arith.maximumf %5, %6 : vector<16x128xf32>
    %c0_6 = arith.constant 0 : index
    %c0_7 = arith.constant 0 : index
    %c0_8 = arith.constant 0 : index
    %8 = vector.load %arg4[%c0_6, %c0_7, %c0_8] : memref<2x128x128xbf16, #tpu.memory_space<vmem>>, vector<1x128x128xbf16>
    %9 = vector.shape_cast %8 : vector<1x128x128xbf16> to vector<128x128xbf16>
    %c0_9 = arith.constant 0 : index
    %c0_10 = arith.constant 0 : index
    %c0_11 = arith.constant 0 : index
    %10 = vector.load %arg5[%c0_9, %c0_10, %c0_11] : memref<2x1x128xf32, #tpu.memory_space<vmem>>, vector<1x1x128xf32>
    %11 = vector.shape_cast %10 : vector<1x1x128xf32> to vector<1x128xf32>
    %12 = arith.truncf %7 : vector<16x128xf32> to vector<16x128xbf16>
    %cst_12 = arith.constant dense<0.000000e+00> : vector<16x128xf32>
    %13 = tpu.matmul %12, %9, %cst_12 {dimension_numbers = #tpu.dot_dimension_numbers<[1], [0], [0], [1], [0, 0, 1, 1], [], []>} : vector<16x128xbf16>, vector<128x128xbf16>, vector<16x128xf32> -> vector<16x128xf32>
    %14 = vector.broadcast %11 : vector<1x128xf32> to vector<16x128xf32>
    %15 = arith.addf %13, %14 : vector<16x128xf32>
    %cst_13 = arith.constant 0.000000e+00 : f32
    %16 = vector.broadcast %cst_13 : f32 to vector<16x128xf32>
    %17 = arith.maximumf %15, %16 : vector<16x128xf32>
    %c1 = arith.constant 1 : index
    %c0_14 = arith.constant 0 : index
    %c0_15 = arith.constant 0 : index
    %18 = vector.load %arg4[%c1, %c0_14, %c0_15] : memref<2x128x128xbf16, #tpu.memory_space<vmem>>, vector<1x128x128xbf16>
    %19 = vector.shape_cast %18 : vector<1x128x128xbf16> to vector<128x128xbf16>
    %c1_16 = arith.constant 1 : index
    %c0_17 = arith.constant 0 : index
    %c0_18 = arith.constant 0 : index
    %20 = vector.load %arg5[%c1_16, %c0_17, %c0_18] : memref<2x1x128xf32, #tpu.memory_space<vmem>>, vector<1x1x128xf32>
    %21 = vector.shape_cast %20 : vector<1x1x128xf32> to vector<1x128xf32>
    %22 = arith.truncf %17 : vector<16x128xf32> to vector<16x128xbf16>
    %cst_19 = arith.constant dense<0.000000e+00> : vector<16x128xf32>
    %23 = tpu.matmul %22, %19, %cst_19 {dimension_numbers = #tpu.dot_dimension_numbers<[1], [0], [0], [1], [0, 0, 1, 1], [], []>} : vector<16x128xbf16>, vector<128x128xbf16>, vector<16x128xf32> -> vector<16x128xf32>
    %24 = vector.broadcast %21 : vector<1x128xf32> to vector<16x128xf32>
    %25 = arith.addf %23, %24 : vector<16x128xf32>
    %cst_20 = arith.constant 0.000000e+00 : f32
    %26 = vector.broadcast %cst_20 : f32 to vector<16x128xf32>
    %27 = arith.maximumf %25, %26 : vector<16x128xf32>
    %28 = arith.truncf %27 : vector<16x128xf32> to vector<16x128xbf16>
    %c0_21 = arith.constant 0 : index
    %c0_22 = arith.constant 0 : index
    %29 = vector.load %arg6[%c0_21, %c0_22] : memref<128x128xbf16, #tpu.memory_space<vmem>>, vector<128x128xbf16>
    %cst_23 = arith.constant dense<0.000000e+00> : vector<16x128xf32>
    %30 = tpu.matmul %28, %29, %cst_23 {dimension_numbers = #tpu.dot_dimension_numbers<[1], [0], [0], [1], [0, 0, 1, 1], [], []>} : vector<16x128xbf16>, vector<128x128xbf16>, vector<16x128xf32> -> vector<16x128xf32>
    %c0_24 = arith.constant 0 : index
    %31 = memref.load %arg7[%c0_24] : memref<1xf32, #tpu.memory_space<smem>>
    %32 = vector.broadcast %31 : f32 to vector<16x128xf32>
    %33 = arith.addf %30, %32 : vector<16x128xf32>
    %c0_25 = arith.constant 0 : index
    %c0_26 = arith.constant 0 : index
    %34 = vector.load %arg8[%c0_25, %c0_26] : memref<16x128xf32, #tpu.memory_space<vmem>>, vector<16x128xf32>
    tpu.vector_store %arg8[%c0_25, %c0_26], %33 {strides = array<i32>} : memref<16x128xf32, #tpu.memory_space<vmem>>, vector<16x128xf32>,
    return
  }
  func.func @transform_0(%arg0: i32) -> (i32, i32) {
    %c0_i32 = arith.constant 0 : i32
    %c0_i32_0 = arith.constant 0 : i32
    return %arg0, %c0_i32 : i32, i32
  }
  func.func @transform_1(%arg0: i32) -> (i32, i32) {
    %c0_i32 = arith.constant 0 : i32
    %c0_i32_0 = arith.constant 0 : i32
    %c0_i32_1 = arith.constant 0 : i32
    return %c0_i32, %c0_i32_0 : i32, i32
  }
  func.func @transform_2(%arg0: i32) -> (i32, i32) {
    %c0_i32 = arith.constant 0 : i32
    %c0_i32_0 = arith.constant 0 : i32
    %c0_i32_1 = arith.constant 0 : i32
    return %c0_i32, %c0_i32_0 : i32, i32
  }
  func.func @transform_3(%arg0: i32) -> (i32, i32, i32) {
    %c0_i32 = arith.constant 0 : i32
    %c0_i32_0 = arith.constant 0 : i32
    %c0_i32_1 = arith.constant 0 : i32
    %c0_i32_2 = arith.constant 0 : i32
    return %c0_i32, %c0_i32_0, %c0_i32_1 : i32, i32, i32
  }
  func.func @transform_4(%arg0: i32) -> (i32, i32, i32) {
    %c0_i32 = arith.constant 0 : i32
    %c0_i32_0 = arith.constant 0 : i32
    %c0_i32_1 = arith.constant 0 : i32
    %c0_i32_2 = arith.constant 0 : i32
    return %c0_i32, %c0_i32_0, %c0_i32_1 : i32, i32, i32
  }
  func.func @transform_5(%arg0: i32) -> (i32, i32) {
    %c0_i32 = arith.constant 0 : i32
    %c0_i32_0 = arith.constant 0 : i32
    %c0_i32_1 = arith.constant 0 : i32
    return %c0_i32, %c0_i32_0 : i32, i32
  }
  func.func @transform_6(%arg0: i32) -> i32 {
    %c0_i32 = arith.constant 0 : i32
    %c0_i32_0 = arith.constant 0 : i32
    return %c0_i32 : i32
  }
  func.func @transform_7(%arg0: i32) -> (i32, i32) {
    %c0_i32 = arith.constant 0 : i32
    %c0_i32_0 = arith.constant 0 : i32
    return %arg0, %c0_i32 : i32, i32
  }
}

</mosaic_0001>

<llo_original>
// kernel: tpu_custom_call.1
$region0: #{tpu_custom_call.1}
  #allocation0 [shape = 'u32[]', space=smem, size = 0x4, offset = 0x4, fixed_abs, tag = 'smem constant byte address 0x4 - core index']
  #allocation1 [shape = 'u32[144,128]{1,0:T(1,128)}', space=vmem, size = 0x12000, scoped, tag = 'internal scratch']
  #allocation2 [shape = 'f32[1]{0:T(128)S(6)}', space=smem, size = 0x200, scoped, tag = 'scoped memory for tpu_custom_call.1']
  %s0 = inlined_call_operand.hbm [shape: bf16[16,128], index: 0, kind: input, shape index: {}]
  %s1 = inlined_call_operand.hbm [shape: bf16[128,128], index: 1, kind: input, shape index: {}]
  %s2 = inlined_call_operand.vmem [shape: f32[1,128], index: 2, kind: input, shape index: {}]
  %s3 = inlined_call_operand.hbm [shape: bf16[2,128,128], index: 3, kind: input, shape index: {}]
  %s4 = inlined_call_operand.vmem [shape: f32[2,1,128], index: 4, kind: input, shape index: {}]
  %s5 = inlined_call_operand.hbm [shape: bf16[128,128], index: 5, kind: input, shape index: {}]
  %s6 = inlined_call_operand.<no memory space> [shape: f32[1], index: 6, kind: input, shape index: {}]
  %s7 = inlined_call_operand.hbm [shape: f32[16,128], index: 7, kind: output, shape index: {}]
  %s8 = sld [smem:[#allocation0]]
  $region54: #{tpu_custom_call.1} parent=0
    _
  %s10 = ssub.s32 1, %s8
  %s11 = scalar_select 0, %s10, %s8
  %12 = sst [smem:[#allocation2]] %s6
  $region1: #{tpu_custom_call.1} parent=0
    #allocation3 [shape = 'u8[4096]{0}', space=vmem, size = 0x1000, scoped, tag = 'input window, operand 0, single buffered']
    #allocation4 [shape = 's32[1]{0}', space=sflag, size = 0x4, scoped, tag = 'scoped memory for tpu_custom_call.1']
    #allocation5 [shape = 's32[1]{0}', space=sflag, size = 0x4, scoped, tag = 'scoped memory for tpu_custom_call.1']
    #allocation6 [shape = 'u8[32768]{0}', space=vmem, size = 0x8000, scoped, tag = 'input window, operand 1, single buffered']
    #allocation7 [shape = 's32[1]{0}', space=sflag, size = 0x4, scoped, tag = 'scoped memory for tpu_custom_call.1']
    #allocation8 [shape = 'u8[65536]{0}', space=vmem, size = 0x10000, scoped, tag = 'input window, operand 3, single buffered']
    #allocation9 [shape = 'u8[32768]{0}', space=vmem, size = 0x8000, scoped, tag = 'input window, operand 5, single buffered']
    #allocation10 [shape = 's32[1]{0}', space=sflag, size = 0x4, scoped, tag = 'scoped memory for tpu_custom_call.1']
    #allocation11 [shape = 'u8[8192]{0}', space=vmem, size = 0x2000, scoped, tag = 'output window, operand 0, single buffered']
    %13 = vsyncpa [#allocation4], 0
    %14 = vsyncpa [#allocation7], 0
    %15 = vsyncpa [#allocation10], 0
    %16 = vsyncpa [#allocation5], 0
    // Predicated region
    $region2: #{tpu_custom_call.1} parent=1 // pred_check
      _
    $region3: #{tpu_custom_call.1} parent=1 // pred_check_branch
      %18 = sbr.rel (0) target = $region5
    $region4: #{tpu_custom_call.1} parent=1 // pred_region
      %s20 = ssub.s32 128, 128
      %21 = vsyncadd [#allocation4], %s20
      %s22 = sshll.u32 [#allocation3], 4
      %s23 = int_to_ptr.vmem [resolvable:$true] %s22
      %28 = dma.hbm_to_vmem [thread:$0]  %s0, 128, %s23, [#allocation4], 64, 64, 4
    $region5: #{tpu_custom_call.1} parent=1 // pred_fallthru
      _
    // Predicated region
    $region6: #{tpu_custom_call.1} parent=1 // pred_check
      _
    $region7: #{tpu_custom_call.1} parent=1 // pred_check_branch
      %30 = sbr.rel (0) target = $region9
    $region8: #{tpu_custom_call.1} parent=1 // pred_region
      %s32 = ssub.s32 1024, 1024
      %33 = vsyncadd [#allocation7], %s32
      %s34 = sshll.u32 [#allocation6], 4
      %s35 = int_to_ptr.vmem [resolvable:$true] %s34
      %40 = dma.hbm_to_vmem [thread:$0]  %s1, 1024, %s35, [#allocation7], 64, 64, 4
    $region9: #{tpu_custom_call.1} parent=1 // pred_fallthru
      _
    // Predicated region
    $region10: #{tpu_custom_call.1} parent=1 // pred_check
      _
    $region11: #{tpu_custom_call.1} parent=1 // pred_check_branch
      %42 = sbr.rel (0) target = $region13
    $region12: #{tpu_custom_call.1} parent=1 // pred_region
      _
    $region13: #{tpu_custom_call.1} parent=1 // pred_fallthru
      _
    // Predicated region
    $region14: #{tpu_custom_call.1} parent=1 // pred_check
      _
    $region15: #{tpu_custom_call.1} parent=1 // pred_check_branch
      %44 = sbr.rel (0) target = $region17
    $region16: #{tpu_custom_call.1} parent=1 // pred_region
      %s46 = ssub.s32 2048, 2048
      %47 = vsyncadd [#allocation7], %s46
      %s48 = sshll.u32 [#allocation8], 4
      %s49 = int_to_ptr.vmem [resolvable:$true] %s48
      %54 = dma.hbm_to_vmem [thread:$0]  %s3, 2048, %s49, [#allocation7], 64, 64, 4
    $region17: #{tpu_custom_call.1} parent=1 // pred_fallthru
      _
    // Predicated region
    $region18: #{tpu_custom_call.1} parent=1 // pred_check
      _
    $region19: #{tpu_custom_call.1} parent=1 // pred_check_branch
      %56 = sbr.rel (0) target = $region21
    $region20: #{tpu_custom_call.1} parent=1 // pred_region
      _
    $region21: #{tpu_custom_call.1} parent=1 // pred_fallthru
      _
    // Predicated region
    $region22: #{tpu_custom_call.1} parent=1 // pred_check
      _
    $region23: #{tpu_custom_call.1} parent=1 // pred_check_branch
      %58 = sbr.rel (0) target = $region25
    $region24: #{tpu_custom_call.1} parent=1 // pred_region
      %s60 = ssub.s32 1024, 1024
      %61 = vsyncadd [#allocation10], %s60
      %s62 = sshll.u32 [#allocation9], 4
      %s63 = int_to_ptr.vmem [resolvable:$true] %s62
      %68 = dma.hbm_to_vmem [thread:$0]  %s5, 1024, %s63, [#allocation10], 64, 64, 4
    $region25: #{tpu_custom_call.1} parent=1 // pred_fallthru
      _
    // Predicated region
    $region26: #{tpu_custom_call.1} parent=1 // pred_check
      _
    $region27: #{tpu_custom_call.1} parent=1 // pred_check_branch
      %70 = sbr.rel (0) target = $region29
    $region28: #{tpu_custom_call.1} parent=1 // pred_region
      _
    $region29: #{tpu_custom_call.1} parent=1 // pred_fallthru
      _
    // Predicated region
    $region30: #{tpu_custom_call.1} parent=1 // pred_check
      _
    $region31: #{tpu_custom_call.1} parent=1 // pred_check_branch
      %72 = sbr.rel (0) target = $region33
    $region32: #{tpu_custom_call.1} parent=1 // pred_region
      %73 = dma.done [#allocation4], 128
    $region33: #{tpu_custom_call.1} parent=1 // pred_fallthru
      _
    // Predicated region
    $region34: #{tpu_custom_call.1} parent=1 // pred_check
      _
    $region35: #{tpu_custom_call.1} parent=1 // pred_check_branch
      %75 = sbr.rel (0) target = $region37
    $region36: #{tpu_custom_call.1} parent=1 // pred_region
      %76 = dma.done [#allocation7], 1024
    $region37: #{tpu_custom_call.1} parent=1 // pred_fallthru
      _
    // Predicated region
    $region38: #{tpu_custom_call.1} parent=1 // pred_check
      _
    $region39: #{tpu_custom_call.1} parent=1 // pred_check_branch
      %78 = sbr.rel (0) target = $region41
    $region40: #{tpu_custom_call.1} parent=1 // pred_region
      %79 = dma.done [#allocation7], 2048
    $region41: #{tpu_custom_call.1} parent=1 // pred_fallthru
      _
    // Predicated region
    $region42: #{tpu_custom_call.1} parent=1 // pred_check
      _
    $region43: #{tpu_custom_call.1} parent=1 // pred_check_branch
      %81 = sbr.rel (0) target = $region45
    $region44: #{tpu_custom_call.1} parent=1 // pred_region
      %82 = dma.done [#allocation10], 1024
    $region45: #{tpu_custom_call.1} parent=1 // pred_fallthru
      _
    %v84 = vld [vmem:[#allocation3] sm:$0xf]
    %v85 = vld [vmem:[#allocation3 + $0x4] sm:$0xf]
    %v86 = vld [vmem:[#allocation6] sm:$0xf]
    %v87 = vld [vmem:[#allocation6 + $0x4] sm:$0xf]
    %v88 = vld [vmem:[#allocation6 + $0x8] sm:$0xf]
    %v89 = vld [vmem:[#allocation6 + $0xc] sm:$0xf]
    %v90 = vld [vmem:[#allocation6 + $0x10] sm:$0xf]
    %v91 = vld [vmem:[#allocation6 + $0x14] sm:$0xf]
    %v92 = vld [vmem:[#allocation6 + $0x18] sm:$0xf]
    %v93 = vld [vmem:[#allocation6 + $0x1c] sm:$0xf]
    %v94 = vld [vmem:[#allocation6 + $0x20] sm:$0xf]
    %v95 = vld [vmem:[#allocation6 + $0x24] sm:$0xf]
    %v96 = vld [vmem:[#allocation6 + $0x28] sm:$0xf]
    %v97 = vld [vmem:[#allocation6 + $0x2c] sm:$0xf]
    %v98 = vld [vmem:[#allocation6 + $0x30] sm:$0xf]
    %v99 = vld [vmem:[#allocation6 + $0x34] sm:$0xf]
    %v100 = vld [vmem:[#allocation6 + $0x38] sm:$0xf]
    %v101 = vld [vmem:[#allocation6 + $0x3c] sm:$0xf]
    %v102 = vld [vmem:[%s2] sm:$0x1]
    %v104 = vlaneseq
    %v105 = vshrl.u32 %v104, 7
    %v106 = vsub.s32 0, %v105
    %v107 = vrot.slane %v102, %v106
    %v111 = vunpack.c.l.b16 %v84
    %v112 = vunpack.c.l.b16 %v85
    %v113 = vpack.c.b16 %v112, %v111
    %v131 = vunpack.c.l.b16 %v86
    %v132 = vunpack.c.l.b16 %v87
    %v133 = vunpack.c.l.b16 %v88
    %v134 = vunpack.c.l.b16 %v89
    %v135 = vunpack.c.l.b16 %v90
    %v136 = vunpack.c.l.b16 %v91
    %v137 = vunpack.c.l.b16 %v92
    %v138 = vunpack.c.l.b16 %v93
    %v139 = vunpack.c.l.b16 %v94
    %v140 = vunpack.c.l.b16 %v95
    %v141 = vunpack.c.l.b16 %v96
    %v142 = vunpack.c.l.b16 %v97
    %v143 = vunpack.c.l.b16 %v98
    %v144 = vunpack.c.l.b16 %v99
    %v145 = vunpack.c.l.b16 %v100
    %v146 = vunpack.c.l.b16 %v101
    %v147 = vpack.c.b16 %v132, %v131
    %v148 = vpack.c.b16 %v134, %v133
    %v149 = vpack.c.b16 %v136, %v135
    %v150 = vpack.c.b16 %v138, %v137
    %v151 = vpack.c.b16 %v140, %v139
    %v152 = vpack.c.b16 %v142, %v141
    %v153 = vpack.c.b16 %v144, %v143
    %v154 = vpack.c.b16 %v146, %v145
    %163 = vmatprep.subr.bf16.mxu0 0
    %164 = vmatpush1.bf16.msra.mxu0 %v147
    %165 = vmatprep.subr.bf16.mxu0 0
    %166 = vmatpush1.bf16.msra.mxu0 %v148
    %167 = vmatprep.subr.bf16.mxu0 0
    %168 = vmatpush1.bf16.msra.mxu0 %v149
    %169 = vmatprep.subr.bf16.mxu0 0
    %170 = vmatpush1.bf16.msra.mxu0 %v150
    %171 = vmatprep.subr.bf16.mxu0 0
    %172 = vmatpush1.bf16.msra.mxu0 %v151
    %173 = vmatprep.subr.bf16.mxu0 0
    %174 = vmatpush1.bf16.msra.mxu0 %v152
    %175 = vmatprep.subr.bf16.mxu0 0
    %176 = vmatpush1.bf16.msra.mxu0 %v153
    %177 = vmatprep.subr.bf16.mxu0 0
    %178 = vmatpush1.bf16.msra.mxu0 %v154
    %179 = vmatprep.subr.bf16.mxu0 0
    %180 = vmatpush1.bf16.msra.mxu0 0
    %181 = vmatprep.subr.bf16.mxu0 0
    %182 = vmatpush1.bf16.msra.mxu0 0
    %183 = vmatprep.subr.bf16.mxu0 0
    %184 = vmatpush1.bf16.msra.mxu0 0
    %185 = vmatprep.subr.bf16.mxu0 0
    %186 = vmatpush1.bf16.msra.mxu0 0
    %187 = vmatprep.subr.bf16.mxu0 0
    %188 = vmatpush1.bf16.msra.mxu0 0
    %189 = vmatprep.subr.bf16.mxu0 0
    %190 = vmatpush1.bf16.msra.mxu0 0
    %191 = vmatprep.subr.bf16.mxu0 0
    %192 = vmatpush1.bf16.msra.mxu0 0
    %193 = vmatprep.subr.bf16.mxu0 0
    %194 = vmatpush1.bf16.msra.mxu0 0
    %195 = vmatprep.mubr.bf16.mxu0 0
    %196 = vmatmul.mubr.bf16.gmra.mrb[0].mxu0 %v113
    %v197 = vpop.f32.mrb[0].mxu0
    %v198 = vadd.f32 %v107, %v197
    %v199 = vpop.f32.mrb[0].mxu0
    %v200 = vpop.f32.mrb[0].mxu0
    %v201 = vadd.f32 %v107, %v200
    %v202 = vpop.f32.mrb[0].mxu0
    %203 = vdwg.mxu0
    %v204 = vmax.f32 %v198, 0.0
    %v205 = vmax.f32 %v201, 0.0
    %v206 = vld [vmem:[#allocation8] sm:$0xf]
    %v207 = vld [vmem:[#allocation8 + $0x4] sm:$0xf]
    %v208 = vld [vmem:[#allocation8 + $0x8] sm:$0xf]
    %v209 = vld [vmem:[#allocation8 + $0xc] sm:$0xf]
    %v210 = vld [vmem:[#allocation8 + $0x10] sm:$0xf]
    %v211 = vld [vmem:[#allocation8 + $0x14] sm:$0xf]
    %v212 = vld [vmem:[#allocation8 + $0x18] sm:$0xf]
    %v213 = vld [vmem:[#allocation8 + $0x1c] sm:$0xf]
    %v214 = vld [vmem:[#allocation8 + $0x20] sm:$0xf]
    %v215 = vld [vmem:[#allocation8 + $0x24] sm:$0xf]
    %v216 = vld [vmem:[#allocation8 + $0x28] sm:$0xf]
    %v217 = vld [vmem:[#allocation8 + $0x2c] sm:$0xf]
    %v218 = vld [vmem:[#allocation8 + $0x30] sm:$0xf]
    %v219 = vld [vmem:[#allocation8 + $0x34] sm:$0xf]
    %v220 = vld [vmem:[#allocation8 + $0x38] sm:$0xf]
    %v221 = vld [vmem:[#allocation8 + $0x3c] sm:$0xf]
    %v222 = vld [vmem:[%s4] sm:$0x1]
    %v223 = vpack.c.bf16 %v205, %v204
    %v225 = vlaneseq
    %v226 = vshrl.u32 %v225, 7
    %v227 = vsub.s32 0, %v226
    %v228 = vrot.slane %v222, %v227
    %v246 = vunpack.c.l.b16 %v206
    %v247 = vunpack.c.l.b16 %v207
    %v248 = vunpack.c.l.b16 %v208
    %v249 = vunpack.c.l.b16 %v209
    %v250 = vunpack.c.l.b16 %v210
    %v251 = vunpack.c.l.b16 %v211
    %v252 = vunpack.c.l.b16 %v212
    %v253 = vunpack.c.l.b16 %v213
    %v254 = vunpack.c.l.b16 %v214
    %v255 = vunpack.c.l.b16 %v215
    %v256 = vunpack.c.l.b16 %v216
    %v257 = vunpack.c.l.b16 %v217
    %v258 = vunpack.c.l.b16 %v218
    %v259 = vunpack.c.l.b16 %v219
    %v260 = vunpack.c.l.b16 %v220
    %v261 = vunpack.c.l.b16 %v221
    %v262 = vpack.c.b16 %v247, %v246
    %v263 = vpack.c.b16 %v249, %v248
    %v264 = vpack.c.b16 %v251, %v250
    %v265 = vpack.c.b16 %v253, %v252
    %v266 = vpack.c.b16 %v255, %v254
    %v267 = vpack.c.b16 %v257, %v256
    %v268 = vpack.c.b16 %v259, %v258
    %v269 = vpack.c.b16 %v261, %v260
    %278 = vmatprep.subr.bf16.mxu0 0
    %279 = vmatpush1.bf16.msra.mxu0 %v262
    %280 = vmatprep.subr.bf16.mxu0 0
    %281 = vmatpush1.bf16.msra.mxu0 %v263
    %282 = vmatprep.subr.bf16.mxu0 0
    %283 = vmatpush1.bf16.msra.mxu0 %v264
    %284 = vmatprep.subr.bf16.mxu0 0
    %285 = vmatpush1.bf16.msra.mxu0 %v265
    %286 = vmatprep.subr.bf16.mxu0 0
    %287 = vmatpush1.bf16.msra.mxu0 %v266
    %288 = vmatprep.subr.bf16.mxu0 0
    %289 = vmatpush1.bf16.msra.mxu0 %v267
    %290 = vmatprep.subr.bf16.mxu0 0
    %291 = vmatpush1.bf16.msra.mxu0 %v268
    %292 = vmatprep.subr.bf16.mxu0 0
    %293 = vmatpush1.bf16.msra.mxu0 %v269
    %294 = vmatprep.subr.bf16.mxu0 0
    %295 = vmatpush1.bf16.msra.mxu0 0
    %296 = vmatprep.subr.bf16.mxu0 0
    %297 = vmatpush1.bf16.msra.mxu0 0
    %298 = vmatprep.subr.bf16.mxu0 0
    %299 = vmatpush1.bf16.msra.mxu0 0
    %300 = vmatprep.subr.bf16.mxu0 0
    %301 = vmatpush1.bf16.msra.mxu0 0
    %302 = vmatprep.subr.bf16.mxu0 0
    %303 = vmatpush1.bf16.msra.mxu0 0
    %304 = vmatprep.subr.bf16.mxu0 0
    %305 = vmatpush1.bf16.msra.mxu0 0
    %306 = vmatprep.subr.bf16.mxu0 0
    %307 = vmatpush1.bf16.msra.mxu0 0
    %308 = vmatprep.subr.bf16.mxu0 0
    %309 = vmatpush1.bf16.msra.mxu0 0
    %310 = vmatprep.mubr.bf16.mxu0 0
    %311 = vmatmul.mubr.bf16.gmra.mrb[0].mxu0 %v223
    %v312 = vpop.f32.mrb[0].mxu0
    %v313 = vadd.f32 %v228, %v312
    %v314 = vpop.f32.mrb[0].mxu0
    %v315 = vpop.f32.mrb[0].mxu0
    %v316 = vadd.f32 %v228, %v315
    %v317 = vpop.f32.mrb[0].mxu0
    %318 = vdwg.mxu0
    %v319 = vmax.f32 %v313, 0.0
    %v320 = vmax.f32 %v316, 0.0
    %s321 = scalar_lea.vmem [#allocation8], 64
    %v322 = vld [vmem:[%s321] sm:$0xf]
    %v323 = vld [vmem:[%s321 + $0x4] sm:$0xf]
    %v324 = vld [vmem:[%s321 + $0x8] sm:$0xf]
    %v325 = vld [vmem:[%s321 + $0xc] sm:$0xf]
    %v326 = vld [vmem:[%s321 + $0x10] sm:$0xf]
    %v327 = vld [vmem:[%s321 + $0x14] sm:$0xf]
    %v328 = vld [vmem:[%s321 + $0x18] sm:$0xf]
    %v329 = vld [vmem:[%s321 + $0x1c] sm:$0xf]
    %v330 = vld [vmem:[%s321 + $0x20] sm:$0xf]
    %v331 = vld [vmem:[%s321 + $0x24] sm:$0xf]
    %v332 = vld [vmem:[%s321 + $0x28] sm:$0xf]
    %v333 = vld [vmem:[%s321 + $0x2c] sm:$0xf]
    %v334 = vld [vmem:[%s321 + $0x30] sm:$0xf]
    %v335 = vld [vmem:[%s321 + $0x34] sm:$0xf]
    %v336 = vld [vmem:[%s321 + $0x38] sm:$0xf]
    %v337 = vld [vmem:[%s321 + $0x3c] sm:$0xf]
    %s338 = scalar_lea.vmem %s4, 1
    %v339 = vld [vmem:[%s338] sm:$0x1]
    %v340 = vpack.c.bf16 %v320, %v319
    %v342 = vlaneseq
    %v343 = vshrl.u32 %v342, 7
    %v344 = vsub.s32 0, %v343
    %v345 = vrot.slane %v339, %v344
    %v363 = vunpack.c.l.b16 %v322
    %v364 = vunpack.c.l.b16 %v323
    %v365 = vunpack.c.l.b16 %v324
    %v366 = vunpack.c.l.b16 %v325
    %v367 = vunpack.c.l.b16 %v326
    %v368 = vunpack.c.l.b16 %v327
    %v369 = vunpack.c.l.b16 %v328
    %v370 = vunpack.c.l.b16 %v329
    %v371 = vunpack.c.l.b16 %v330
    %v372 = vunpack.c.l.b16 %v331
    %v373 = vunpack.c.l.b16 %v332
    %v374 = vunpack.c.l.b16 %v333
    %v375 = vunpack.c.l.b16 %v334
    %v376 = vunpack.c.l.b16 %v335
    %v377 = vunpack.c.l.b16 %v336
    %v378 = vunpack.c.l.b16 %v337
    %v379 = vpack.c.b16 %v364, %v363
    %v380 = vpack.c.b16 %v366, %v365
    %v381 = vpack.c.b16 %v368, %v367
    %v382 = vpack.c.b16 %v370, %v369
    %v383 = vpack.c.b16 %v372, %v371
    %v384 = vpack.c.b16 %v374, %v373
    %v385 = vpack.c.b16 %v376, %v375
    %v386 = vpack.c.b16 %v378, %v377
    %395 = vmatprep.subr.bf16.mxu0 0
    %396 = vmatpush1.bf16.msra.mxu0 %v379
    %397 = vmatprep.subr.bf16.mxu0 0
    %398 = vmatpush1.bf16.msra.mxu0 %v380
    %399 = vmatprep.subr.bf16.mxu0 0
    %400 = vmatpush1.bf16.msra.mxu0 %v381
    %401 = vmatprep.subr.bf16.mxu0 0
    %402 = vmatpush1.bf16.msra.mxu0 %v382
    %403 = vmatprep.subr.bf16.mxu0 0
    %404 = vmatpush1.bf16.msra.mxu0 %v383
    %405 = vmatprep.subr.bf16.mxu0 0
    %406 = vmatpush1.bf16.msra.mxu0 %v384
    %407 = vmatprep.subr.bf16.mxu0 0
    %408 = vmatpush1.bf16.msra.mxu0 %v385
    %409 = vmatprep.subr.bf16.mxu0 0
    %410 = vmatpush1.bf16.msra.mxu0 %v386
    %411 = vmatprep.subr.bf16.mxu0 0
    %412 = vmatpush1.bf16.msra.mxu0 0
    %413 = vmatprep.subr.bf16.mxu0 0
    %414 = vmatpush1.bf16.msra.mxu0 0
    %415 = vmatprep.subr.bf16.mxu0 0
    %416 = vmatpush1.bf16.msra.mxu0 0
    %417 = vmatprep.subr.bf16.mxu0 0
    %418 = vmatpush1.bf16.msra.mxu0 0
    %419 = vmatprep.subr.bf16.mxu0 0
    %420 = vmatpush1.bf16.msra.mxu0 0
    %421 = vmatprep.subr.bf16.mxu0 0
    %422 = vmatpush1.bf16.msra.mxu0 0
    %423 = vmatprep.subr.bf16.mxu0 0
    %424 = vmatpush1.bf16.msra.mxu0 0
    %425 = vmatprep.subr.bf16.mxu0 0
    %426 = vmatpush1.bf16.msra.mxu0 0
    %427 = vmatprep.mubr.bf16.mxu0 0
    %428 = vmatmul.mubr.bf16.gmra.mrb[0].mxu0 %v340
    %v429 = vpop.f32.mrb[0].mxu0
    %v430 = vadd.f32 %v345, %v429
    %v431 = vpop.f32.mrb[0].mxu0
    %v432 = vpop.f32.mrb[0].mxu0
    %v433 = vadd.f32 %v345, %v432
    %v434 = vpop.f32.mrb[0].mxu0
    %435 = vdwg.mxu0
    %v436 = vmax.f32 %v430, 0.0
    %v437 = vmax.f32 %v433, 0.0
    %v438 = vpack.c.bf16 %v437, %v436
    %v439 = vld [vmem:[#allocation9] sm:$0xf]
    %v440 = vld [vmem:[#allocation9 + $0x4] sm:$0xf]
    %v441 = vld [vmem:[#allocation9 + $0x8] sm:$0xf]
    %v442 = vld [vmem:[#allocation9 + $0xc] sm:$0xf]
    %v443 = vld [vmem:[#allocation9 + $0x10] sm:$0xf]
    %v444 = vld [vmem:[#allocation9 + $0x14] sm:$0xf]
    %v445 = vld [vmem:[#allocation9 + $0x18] sm:$0xf]
    %v446 = vld [vmem:[#allocation9 + $0x1c] sm:$0xf]
    %v447 = vld [vmem:[#allocation9 + $0x20] sm:$0xf]
    %v448 = vld [vmem:[#allocation9 + $0x24] sm:$0xf]
    %v449 = vld [vmem:[#allocation9 + $0x28] sm:$0xf]
    %v450 = vld [vmem:[#allocation9 + $0x2c] sm:$0xf]
    %v451 = vld [vmem:[#allocation9 + $0x30] sm:$0xf]
    %v452 = vld [vmem:[#allocation9 + $0x34] sm:$0xf]
    %v453 = vld [vmem:[#allocation9 + $0x38] sm:$0xf]
    %v454 = vld [vmem:[#allocation9 + $0x3c] sm:$0xf]
    %s455 = sld [smem:[#allocation2]]
    %v456 = vstv %s455
    %v473 = vunpack.c.l.b16 %v439
    %v474 = vunpack.c.l.b16 %v440
    %v475 = vunpack.c.l.b16 %v441
    %v476 = vunpack.c.l.b16 %v442
    %v477 = vunpack.c.l.b16 %v443
    %v478 = vunpack.c.l.b16 %v444
    %v479 = vunpack.c.l.b16 %v445
    %v480 = vunpack.c.l.b16 %v446
    %v481 = vunpack.c.l.b16 %v447
    %v482 = vunpack.c.l.b16 %v448
    %v483 = vunpack.c.l.b16 %v449
    %v484 = vunpack.c.l.b16 %v450
    %v485 = vunpack.c.l.b16 %v451
    %v486 = vunpack.c.l.b16 %v452
    %v487 = vunpack.c.l.b16 %v453
    %v488 = vunpack.c.l.b16 %v454
    %v489 = vpack.c.b16 %v474, %v473
    %v490 = vpack.c.b16 %v476, %v475
    %v491 = vpack.c.b16 %v478, %v477
    %v492 = vpack.c.b16 %v480, %v479
    %v493 = vpack.c.b16 %v482, %v481
    %v494 = vpack.c.b16 %v484, %v483
    %v495 = vpack.c.b16 %v486, %v485
    %v496 = vpack.c.b16 %v488, %v487
    %505 = vmatprep.subr.bf16.mxu0 0
    %506 = vmatpush1.bf16.msra.mxu0 %v489
    %507 = vmatprep.subr.bf16.mxu0 0
    %508 = vmatpush1.bf16.msra.mxu0 %v490
    %509 = vmatprep.subr.bf16.mxu0 0
    %510 = vmatpush1.bf16.msra.mxu0 %v491
    %511 = vmatprep.subr.bf16.mxu0 0
    %512 = vmatpush1.bf16.msra.mxu0 %v492
    %513 = vmatprep.subr.bf16.mxu0 0
    %514 = vmatpush1.bf16.msra.mxu0 %v493
    %515 = vmatprep.subr.bf16.mxu0 0
    %516 = vmatpush1.bf16.msra.mxu0 %v494
    %517 = vmatprep.subr.bf16.mxu0 0
    %518 = vmatpush1.bf16.msra.mxu0 %v495
    %519 = vmatprep.subr.bf16.mxu0 0
    %520 = vmatpush1.bf16.msra.mxu0 %v496
    %521 = vmatprep.subr.bf16.mxu0 0
    %522 = vmatpush1.bf16.msra.mxu0 0
    %523 = vmatprep.subr.bf16.mxu0 0
    %524 = vmatpush1.bf16.msra.mxu0 0
    %525 = vmatprep.subr.bf16.mxu0 0
    %526 = vmatpush1.bf16.msra.mxu0 0
    %527 = vmatprep.subr.bf16.mxu0 0
    %528 = vmatpush1.bf16.msra.mxu0 0
    %529 = vmatprep.subr.bf16.mxu0 0
    %530 = vmatpush1.bf16.msra.mxu0 0
    %531 = vmatprep.subr.bf16.mxu0 0
    %532 = vmatpush1.bf16.msra.mxu0 0
    %533 = vmatprep.subr.bf16.mxu0 0
    %534 = vmatpush1.bf16.msra.mxu0 0
    %535 = vmatprep.subr.bf16.mxu0 0
    %536 = vmatpush1.bf16.msra.mxu0 0
    %537 = vmatprep.mubr.bf16.mxu0 0
    %538 = vmatmul.mubr.bf16.gmra.mrb[0].mxu0 %v438
    %v539 = vpop.f32.mrb[0].mxu0
    %v540 = vadd.f32 %v456, %v539
    %v541 = vpop.f32.mrb[0].mxu0
    %v542 = vpop.f32.mrb[0].mxu0
    %v543 = vadd.f32 %v456, %v542
    %v544 = vpop.f32.mrb[0].mxu0
    %545 = vdwg.mxu0
    %546 = vst [vmem:[#allocation11] sm:$0xff] %v540
    %547 = vst [vmem:[#allocation11 + $0x8] sm:$0xff] %v543
    // Predicated region
    $region46: #{tpu_custom_call.1} parent=1 // pred_check
      _
    $region47: #{tpu_custom_call.1} parent=1 // pred_check_branch
      %549 = sbr.rel (0) target = $region49
    $region48: #{tpu_custom_call.1} parent=1 // pred_region
      %s551 = ssub.s32 256, 256
      %552 = vsyncadd [#allocation5], %s551
      %s553 = sshll.u32 [#allocation11], 4
      %s554 = int_to_ptr.vmem [resolvable:$true] %s553
      %559 = dma.vmem_to_hbm [thread:$0]  %s554, 256, %s7, [#allocation5], 128, 128, 8
    $region49: #{tpu_custom_call.1} parent=1 // pred_fallthru
      _
    // Predicated region
    $region50: #{tpu_custom_call.1} parent=1 // pred_check
      _
    $region51: #{tpu_custom_call.1} parent=1 // pred_check_branch
      %561 = sbr.rel (0) target = $region53
    $region52: #{tpu_custom_call.1} parent=1 // pred_region
      %562 = dma.done [#allocation5], 256
    $region53: #{tpu_custom_call.1} parent=1 // pred_fallthru
      _
    %563 = vsyncpa [#allocation4], 1
    %564 = vsyncpa [#allocation7], 1
    %565 = vsyncpa [#allocation10], 1
    %566 = vsyncpa [#allocation5], 1

</llo_original>
